<compile_context>
chip_gen: v5e
topology: v5e:2x2
jax: 0.10.0
libtpu: 0.0.40
codegen_flags: <defaults>
</compile_context>

<pallas_src>
import jax
import jax.numpy as jnp
from jax.experimental import pallas as pl
from jax.experimental.pallas import tpu as pltpu

LOGIT_PAD = 128  # lane-dense padded width of the final logits (real logits = first 2 lanes)


def _round_up(x, m):
    return ((x + m - 1) // m) * m


def _mlp_kernel(x_ref, w1_ref, t1_ref, w2_ref, t2_ref, w3_ref, b3_ref, out_ref):
    """One batch-tile of the classifier head.

    x:   (TILE_B, D)      bf16
    w1:  (D, D/2)         bf16  (BN1 scale folded in)     t1: (1, D/2)  f32
    w2:  (D/2, D/4)       bf16  (BN2 scale folded in)     t2: (1, D/4)  f32
    w3:  (D/4, 128)       bf16  (lane-padded, cols 2..127 are zero)
    b3:  (1, 128)         f32
    out: (TILE_B, 128)    f32
    """
    x = x_ref[...]

    # Layer 1: Linear (BN scale pre-folded into columns) -> shift -> ReLU (f32)
    h1 = jnp.dot(x, w1_ref[...], preferred_element_type=jnp.float32)
    h1 = jnp.maximum(h1 + t1_ref[...], 0.0)

    # Layer 2
    h2 = jnp.dot(h1.astype(w2_ref.dtype), w2_ref[...],
                 preferred_element_type=jnp.float32)
    h2 = jnp.maximum(h2 + t2_ref[...], 0.0)

    # Layer 3 (lane-padded to 128 output columns for a dense, unmasked store)
    logits = jnp.dot(h2.astype(w3_ref.dtype), w3_ref[...],
                     preferred_element_type=jnp.float32)
    out_ref[...] = (logits + b3_ref[...]).astype(out_ref.dtype)


def ffbase_classifier(x, params, *, tile_b=None):
    """Run the FFBase classifier head with a batch-gridded Pallas call."""
    w1, t1, w2, t2, w3p, b3p = params
    B, D = x.shape
    D1 = w1.shape[1]
    D2 = w2.shape[1]

    # Batch tile: big enough to feed the MXU, small enough that
    # 2x double-buffered x tiles + weights + intermediates stay well under the
    # 32 MiB scoped-VMEM default on v7x (64 MiB physical per TC).
    if tile_b is None:
        tile_b = min(512, max(_round_up(B, 16), 16))
    B_pad = _round_up(B, tile_b)

    x_bf16 = x.astype(jnp.bfloat16)
    if B_pad != B:
        x_bf16 = jnp.pad(x_bf16, ((0, B_pad - B), (0, 0)))

    grid = (B_pad // tile_b,)

    def nbytes(a):
        return a.size * a.dtype.itemsize

    weight_bytes = sum(nbytes(a) for a in (w1, t1, w2, t2, w3p, b3p))
    tile_footprint = (
        2 * tile_b * D * 2                       # double-buffered x tiles (bf16)
        + 2 * tile_b * LOGIT_PAD * 4             # double-buffered out tiles (f32)
        + weight_bytes                           # resident weights / shifts
        + tile_b * (D1 + D2 + LOGIT_PAD) * 4     # f32 intermediates
    )
    vmem_limit = int(min(max(2 * tile_footprint, 16 * 1024 * 1024),
                         96 * 1024 * 1024))

    flops = 2 * B_pad * (D * D1 + D1 * D2 + D2 * LOGIT_PAD)
    bytes_accessed = B_pad * D * 2 + weight_bytes + B_pad * LOGIT_PAD * 4

    resident = lambda i: (0, 0)   # weights/shifts stay in VMEM across all grid steps

    out_padded = pl.pallas_call(
        _mlp_kernel,
        out_shape=jax.ShapeDtypeStruct((B_pad, LOGIT_PAD), jnp.float32),
        grid=grid,
        in_specs=[
            pl.BlockSpec((tile_b, D), lambda i: (i, 0)),     # x, tiled over batch
            pl.BlockSpec((D, D1), resident),                 # w1 (folded)
            pl.BlockSpec((1, D1), resident),                 # t1
            pl.BlockSpec((D1, D2), resident),                # w2 (folded)
            pl.BlockSpec((1, D2), resident),                 # t2
            pl.BlockSpec((D2, LOGIT_PAD), resident),         # w3 (lane-padded)
            pl.BlockSpec((1, LOGIT_PAD), resident),          # b3 (lane-padded)
        ],
        out_specs=pl.BlockSpec((tile_b, LOGIT_PAD), lambda i: (i, 0)),
        compiler_params=pltpu.CompilerParams(
            dimension_semantics=("parallel",),
            vmem_limit_bytes=vmem_limit,
        ),
        cost_estimate=pl.CostEstimate(
            flops=flops, transcendentals=0, bytes_accessed=bytes_accessed),
    )(x_bf16, w1, t1, w2, t2, w3p, b3p)

    # Slice away the batch padding and the lane padding (only 2 real logits).
    return out_padded[:B, :2]


def init_params(key, in_dim):
    """Deterministic init mirroring PyTorch defaults, with BN folded into the weights.

    Linear: U(-1/sqrt(fan_in), 1/sqrt(fan_in)) for weight and bias.
    BatchNorm1d: gamma=1, beta=0, running_mean=0, running_var=1 (eval mode).
    BN scale is folded into the weight columns; the additive shift stays as a bias.
    Weights are stored bf16 (MXU-native), shifts/biases stay f32.
    """
    d1_in, d1_out = in_dim, in_dim // 2
    d2_in, d2_out = d1_out, d1_out // 2
    d3_in = d2_out
    eps = 1e-5

    ks = jax.random.split(key, 6)

    def lin_init(kw, kb, fan_in, fan_out):
        bound = 1.0 / jnp.sqrt(jnp.float32(fan_in))
        # Store weight as (fan_in, fan_out) so the kernel does x @ W directly.
        w = jax.random.uniform(kw, (fan_in, fan_out), jnp.float32, -bound, bound)
        b = jax.random.uniform(kb, (1, fan_out), jnp.float32, -bound, bound)
        return w, b

    w1, b1 = lin_init(ks[0], ks[1], d1_in, d1_out)
    w2, b2 = lin_init(ks[2], ks[3], d2_in, d2_out)
    w3, b3 = lin_init(ks[4], ks[5], d3_in, 2)

    def fold_bn(w, bias, dim):
        gamma = jnp.ones((1, dim), jnp.float32)
        beta = jnp.zeros((1, dim), jnp.float32)
        running_mean = jnp.zeros((1, dim), jnp.float32)
        running_var = jnp.ones((1, dim), jnp.float32)
        scale = gamma / jnp.sqrt(running_var + eps)
        # BN((x@W) + bias) = x @ (W*scale) + ((bias - mean)*scale + beta)
        return w * scale, (bias - running_mean) * scale + beta

    w1f, t1 = fold_bn(w1, b1, d1_out)
    w2f, t2 = fold_bn(w2, b2, d2_out)

    # Lane-dense pad of the final (D/4, 2) projection to 128 output columns.
    w3p = jnp.zeros((d3_in, LOGIT_PAD), jnp.float32).at[:, :2].set(w3)
    b3p = jnp.zeros((1, LOGIT_PAD), jnp.float32).at[:, :2].set(b3)

    return (w1f.astype(jnp.bfloat16), t1,
            w2f.astype(jnp.bfloat16), t2,
            w3p.astype(jnp.bfloat16), b3p)


def reference(x, params):
    """Pure-JAX reference (f32 math on the bf16-rounded weights)."""
    w1, t1, w2, t2, w3p, b3p = params
    w1 = w1.astype(jnp.float32)
    w2 = w2.astype(jnp.float32)
    w3p = w3p.astype(jnp.float32)
    h1 = jnp.maximum(x @ w1 + t1, 0.0)
    h2 = jnp.maximum(h1 @ w2 + t2, 0.0)
    return (h2 @ w3p + b3p)[:, :2]


if __name__ == "__main__":
    key = jax.random.PRNGKey(0)
    k_param, k_x = jax.random.split(key)

    B = 8          # batch
    IN_DIM = 256   # in_dim (divisible by 4); small stand-in for the default 1024

    params = init_params(k_param, IN_DIM)
    x = jax.random.normal(k_x, (B, IN_DIM), jnp.float32)

    out = ffbase_classifier(x, params)
    out = jax.block_until_ready(out)

    ref = reference(x, params)
    assert out.shape == (B, 2)
    # bf16 activations into the MXU (f32 accumulation) -> loosened tolerance vs f32 ref.
    assert jnp.allclose(out, ref, atol=3e-2, rtol=3e-2), (out, ref)

    print("KERNEL_OK")
</pallas_src>

<mosaic_0001>
module attributes {stable_mosaic.version = 11 : i64} {
  func.func @_mlp_kernel(%arg0: i32, %arg1: memref<16x256xbf16, #tpu.memory_space<vmem>>, %arg2: memref<256x128xbf16, #tpu.memory_space<vmem>>, %arg3: memref<1x128xf32, #tpu.memory_space<vmem>>, %arg4: memref<128x64xbf16, #tpu.memory_space<vmem>>, %arg5: memref<1x64xf32, #tpu.memory_space<vmem>>, %arg6: memref<64x128xbf16, #tpu.memory_space<vmem>>, %arg7: memref<1x128xf32, #tpu.memory_space<vmem>>, %arg8: memref<16x128xf32, #tpu.memory_space<vmem>>) attributes {dimension_semantics = [#tpu.dimension_semantics<parallel>], iteration_bounds = array<i64: 1>, scalar_prefetch = 0 : i64, scratch_operands = 0 : i64, tpu.core_type = #tpu.core_type<tc>, window_params = [{transform_indices = @transform_0, window_bounds = array<i64: 16, 256>}, {pipeline_mode = #tpu.pipeline_mode<synchronous>, transform_indices = @transform_1, window_bounds = array<i64: 256, 128>}, {pipeline_mode = #tpu.pipeline_mode<synchronous>, transform_indices = @transform_2, window_bounds = array<i64: 1, 128>}, {pipeline_mode = #tpu.pipeline_mode<synchronous>, transform_indices = @transform_3, window_bounds = array<i64: 128, 64>}, {pipeline_mode = #tpu.pipeline_mode<synchronous>, transform_indices = @transform_4, window_bounds = array<i64: 1, 64>}, {pipeline_mode = #tpu.pipeline_mode<synchronous>, transform_indices = @transform_5, window_bounds = array<i64: 64, 128>}, {pipeline_mode = #tpu.pipeline_mode<synchronous>, transform_indices = @transform_6, window_bounds = array<i64: 1, 128>}, {transform_indices = @transform_7, window_bounds = array<i64: 16, 128>}]} {
    %c0 = arith.constant 0 : index
    %c0_0 = arith.constant 0 : index
    %0 = vector.load %arg1[%c0, %c0_0] : memref<16x256xbf16, #tpu.memory_space<vmem>>, vector<16x256xbf16>
    %c0_1 = arith.constant 0 : index
    %c0_2 = arith.constant 0 : index
    %1 = vector.load %arg2[%c0_1, %c0_2] : memref<256x128xbf16, #tpu.memory_space<vmem>>, vector<256x128xbf16>
    %cst = arith.constant dense<0.000000e+00> : vector<16x128xf32>
    %2 = tpu.matmul %0, %1, %cst {dimension_numbers = #tpu.dot_dimension_numbers<[1], [0], [0], [1], [0, 0, 1, 1], [], []>} : vector<16x256xbf16>, vector<256x128xbf16>, vector<16x128xf32> -> vector<16x128xf32>
    %c0_3 = arith.constant 0 : index
    %c0_4 = arith.constant 0 : index
    %3 = vector.load %arg3[%c0_3, %c0_4] : memref<1x128xf32, #tpu.memory_space<vmem>>, vector<1x128xf32>
    %4 = vector.broadcast %3 : vector<1x128xf32> to vector<16x128xf32>
    %5 = arith.addf %2, %4 : vector<16x128xf32>
    %cst_5 = arith.constant 0.000000e+00 : f32
    %6 = vector.broadcast %cst_5 : f32 to vector<16x128xf32>
    %7 = arith.maximumf %5, %6 : vector<16x128xf32>
    %8 = arith.truncf %7 : vector<16x128xf32> to vector<16x128xbf16>
    %c0_6 = arith.constant 0 : index
    %c0_7 = arith.constant 0 : index
    %9 = vector.load %arg4[%c0_6, %c0_7] : memref<128x64xbf16, #tpu.memory_space<vmem>>, vector<128x64xbf16>
    %cst_8 = arith.constant dense<0.000000e+00> : vector<16x64xf32>
    %10 = tpu.matmul %8, %9, %cst_8 {dimension_numbers = #tpu.dot_dimension_numbers<[1], [0], [0], [1], [0, 0, 1, 1], [], []>} : vector<16x128xbf16>, vector<128x64xbf16>, vector<16x64xf32> -> vector<16x64xf32>
    %c0_9 = arith.constant 0 : index
    %c0_10 = arith.constant 0 : index
    %11 = vector.load %arg5[%c0_9, %c0_10] : memref<1x64xf32, #tpu.memory_space<vmem>>, vector<1x64xf32>
    %12 = vector.broadcast %11 : vector<1x64xf32> to vector<16x64xf32>
    %13 = arith.addf %10, %12 : vector<16x64xf32>
    %cst_11 = arith.constant 0.000000e+00 : f32
    %14 = vector.broadcast %cst_11 : f32 to vector<16x64xf32>
    %15 = arith.maximumf %13, %14 : vector<16x64xf32>
    %16 = arith.truncf %15 : vector<16x64xf32> to vector<16x64xbf16>
    %c0_12 = arith.constant 0 : index
    %c0_13 = arith.constant 0 : index
    %17 = vector.load %arg6[%c0_12, %c0_13] : memref<64x128xbf16, #tpu.memory_space<vmem>>, vector<64x128xbf16>
    %cst_14 = arith.constant dense<0.000000e+00> : vector<16x128xf32>
    %18 = tpu.matmul %16, %17, %cst_14 {dimension_numbers = #tpu.dot_dimension_numbers<[1], [0], [0], [1], [0, 0, 1, 1], [], []>} : vector<16x64xbf16>, vector<64x128xbf16>, vector<16x128xf32> -> vector<16x128xf32>
    %c0_15 = arith.constant 0 : index
    %c0_16 = arith.constant 0 : index
    %19 = vector.load %arg7[%c0_15, %c0_16] : memref<1x128xf32, #tpu.memory_space<vmem>>, vector<1x128xf32>
    %20 = vector.broadcast %19 : vector<1x128xf32> to vector<16x128xf32>
    %21 = arith.addf %18, %20 : vector<16x128xf32>
    %c0_17 = arith.constant 0 : index
    %c0_18 = arith.constant 0 : index
    %22 = vector.load %arg8[%c0_17, %c0_18] : memref<16x128xf32, #tpu.memory_space<vmem>>, vector<16x128xf32>
    tpu.vector_store %arg8[%c0_17, %c0_18], %21 {strides = array<i32>} : memref<16x128xf32, #tpu.memory_space<vmem>>, vector<16x128xf32>,
    return
  }
  func.func @transform_0(%arg0: i32) -> (i32, i32) {
    %c0_i32 = arith.constant 0 : i32
    %c0_i32_0 = arith.constant 0 : i32
    return %arg0, %c0_i32 : i32, i32
  }
  func.func @transform_1(%arg0: i32) -> (i32, i32) {
    %c0_i32 = arith.constant 0 : i32
    %c0_i32_0 = arith.constant 0 : i32
    %c0_i32_1 = arith.constant 0 : i32
    return %c0_i32, %c0_i32_0 : i32, i32
  }
  func.func @transform_2(%arg0: i32) -> (i32, i32) {
    %c0_i32 = arith.constant 0 : i32
    %c0_i32_0 = arith.constant 0 : i32
    %c0_i32_1 = arith.constant 0 : i32
    return %c0_i32, %c0_i32_0 : i32, i32
  }
  func.func @transform_3(%arg0: i32) -> (i32, i32) {
    %c0_i32 = arith.constant 0 : i32
    %c0_i32_0 = arith.constant 0 : i32
    %c0_i32_1 = arith.constant 0 : i32
    return %c0_i32, %c0_i32_0 : i32, i32
  }
  func.func @transform_4(%arg0: i32) -> (i32, i32) {
    %c0_i32 = arith.constant 0 : i32
    %c0_i32_0 = arith.constant 0 : i32
    %c0_i32_1 = arith.constant 0 : i32
    return %c0_i32, %c0_i32_0 : i32, i32
  }
  func.func @transform_5(%arg0: i32) -> (i32, i32) {
    %c0_i32 = arith.constant 0 : i32
    %c0_i32_0 = arith.constant 0 : i32
    %c0_i32_1 = arith.constant 0 : i32
    return %c0_i32, %c0_i32_0 : i32, i32
  }
  func.func @transform_6(%arg0: i32) -> (i32, i32) {
    %c0_i32 = arith.constant 0 : i32
    %c0_i32_0 = arith.constant 0 : i32
    %c0_i32_1 = arith.constant 0 : i32
    return %c0_i32, %c0_i32_0 : i32, i32
  }
  func.func @transform_7(%arg0: i32) -> (i32, i32) {
    %c0_i32 = arith.constant 0 : i32
    %c0_i32_0 = arith.constant 0 : i32
    return %arg0, %c0_i32 : i32, i32
  }
}

</mosaic_0001>

<llo_original>
// kernel: tpu_custom_call.1
$region0: #{tpu_custom_call.1}
  #allocation0 [shape = 'u32[]', space=smem, size = 0x4, offset = 0x4, fixed_abs, tag = 'smem constant byte address 0x4 - core index']
  #allocation1 [shape = 'u32[72,128]{1,0:T(1,128)}', space=vmem, size = 0x9000, scoped, tag = 'internal scratch']
  %s0 = inlined_call_operand.vmem [shape: bf16[16,256], index: 0, kind: input, shape index: {}]
  %s1 = inlined_call_operand.hbm [shape: bf16[256,128], index: 1, kind: input, shape index: {}]
  %s2 = inlined_call_operand.vmem [shape: f32[1,128], index: 2, kind: input, shape index: {}]
  %s3 = inlined_call_operand.vmem [shape: bf16[128,64], index: 3, kind: input, shape index: {}]
  %s4 = inlined_call_operand.vmem [shape: f32[1,64], index: 4, kind: input, shape index: {}]
  %s5 = inlined_call_operand.vmem [shape: bf16[64,128], index: 5, kind: input, shape index: {}]
  %s6 = inlined_call_operand.vmem [shape: f32[1,128], index: 6, kind: input, shape index: {}]
  %s7 = inlined_call_operand.hbm [shape: f32[16,128], index: 7, kind: output, shape index: {}]
  %s8 = sld [smem:[#allocation0]]
  $region42: #{tpu_custom_call.1} parent=0
    _
  %s10 = ssub.s32 1, %s8
  %s11 = scalar_select 0, %s10, %s8
  $region1: #{tpu_custom_call.1} parent=0
    #allocation2 [shape = 'u8[65536]{0}', space=vmem, size = 0x10000, scoped, tag = 'input window, operand 1, single buffered']
    #allocation3 [shape = 's32[1]{0}', space=sflag, size = 0x4, scoped, tag = 'scoped memory for tpu_custom_call.1']
    #allocation4 [shape = 's32[1]{0}', space=sflag, size = 0x4, scoped, tag = 'scoped memory for tpu_custom_call.1']
    #allocation5 [shape = 'u8[8192]{0}', space=vmem, size = 0x2000, scoped, tag = 'output window, operand 0, single buffered']
    %12 = vsyncpa [#allocation3], 0
    %13 = vsyncpa [#allocation4], 0
    // Predicated region
    $region2: #{tpu_custom_call.1} parent=1 // pred_check
      _
    $region3: #{tpu_custom_call.1} parent=1 // pred_check_branch
      %15 = sbr.rel (0) target = $region5
    $region4: #{tpu_custom_call.1} parent=1 // pred_region
      _
    $region5: #{tpu_custom_call.1} parent=1 // pred_fallthru
      _
    // Predicated region
    $region6: #{tpu_custom_call.1} parent=1 // pred_check
      _
    $region7: #{tpu_custom_call.1} parent=1 // pred_check_branch
      %17 = sbr.rel (0) target = $region9
    $region8: #{tpu_custom_call.1} parent=1 // pred_region
      %19 = vsyncadd [#allocation3], 0
      %s20 = sshll.u32 %s1, 4
      %s21 = int_to_ptr.hbm [resolvable:$true] %s20
      %s22 = sshll.u32 [#allocation2], 4
      %s23 = int_to_ptr.vmem [resolvable:$true] %s22
      %28 = dma.hbm_to_vmem [thread:$0]  %s21, 2048, %s23, [#allocation3], 64, 64, 4
    $region9: #{tpu_custom_call.1} parent=1 // pred_fallthru
      _
    // Predicated region
    $region10: #{tpu_custom_call.1} parent=1 // pred_check
      _
    $region11: #{tpu_custom_call.1} parent=1 // pred_check_branch
      %30 = sbr.rel (0) target = $region13
    $region12: #{tpu_custom_call.1} parent=1 // pred_region
      _
    $region13: #{tpu_custom_call.1} parent=1 // pred_fallthru
      _
    // Predicated region
    $region14: #{tpu_custom_call.1} parent=1 // pred_check
      _
    $region15: #{tpu_custom_call.1} parent=1 // pred_check_branch
      %32 = sbr.rel (0) target = $region17
    $region16: #{tpu_custom_call.1} parent=1 // pred_region
      _
    $region17: #{tpu_custom_call.1} parent=1 // pred_fallthru
      _
    // Predicated region
    $region18: #{tpu_custom_call.1} parent=1 // pred_check
      _
    $region19: #{tpu_custom_call.1} parent=1 // pred_check_branch
      %34 = sbr.rel (0) target = $region21
    $region20: #{tpu_custom_call.1} parent=1 // pred_region
      _
    $region21: #{tpu_custom_call.1} parent=1 // pred_fallthru
      _
    // Predicated region
    $region22: #{tpu_custom_call.1} parent=1 // pred_check
      _
    $region23: #{tpu_custom_call.1} parent=1 // pred_check_branch
      %36 = sbr.rel (0) target = $region25
    $region24: #{tpu_custom_call.1} parent=1 // pred_region
      _
    $region25: #{tpu_custom_call.1} parent=1 // pred_fallthru
      _
    // Predicated region
    $region26: #{tpu_custom_call.1} parent=1 // pred_check
      _
    $region27: #{tpu_custom_call.1} parent=1 // pred_check_branch
      %38 = sbr.rel (0) target = $region29
    $region28: #{tpu_custom_call.1} parent=1 // pred_region
      _
    $region29: #{tpu_custom_call.1} parent=1 // pred_fallthru
      _
    // Predicated region
    $region30: #{tpu_custom_call.1} parent=1 // pred_check
      _
    $region31: #{tpu_custom_call.1} parent=1 // pred_check_branch
      %40 = sbr.rel (0) target = $region33
    $region32: #{tpu_custom_call.1} parent=1 // pred_region
      %42 = dma.done [#allocation3], 2048
    $region33: #{tpu_custom_call.1} parent=1 // pred_fallthru
      _
    %v44 = vld [vmem:[%s0] sm:$0xff]
    %v45 = vld [vmem:[%s0 + $0x8] sm:$0xff]
    %v46 = vld [vmem:[#allocation2] sm:$0xf]
    %v47 = vld [vmem:[#allocation2 + $0x4] sm:$0xf]
    %v48 = vld [vmem:[#allocation2 + $0x8] sm:$0xf]
    %v49 = vld [vmem:[#allocation2 + $0xc] sm:$0xf]
    %v50 = vld [vmem:[#allocation2 + $0x10] sm:$0xf]
    %v51 = vld [vmem:[#allocation2 + $0x14] sm:$0xf]
    %v52 = vld [vmem:[#allocation2 + $0x18] sm:$0xf]
    %v53 = vld [vmem:[#allocation2 + $0x1c] sm:$0xf]
    %v54 = vld [vmem:[#allocation2 + $0x20] sm:$0xf]
    %v55 = vld [vmem:[#allocation2 + $0x24] sm:$0xf]
    %v56 = vld [vmem:[#allocation2 + $0x28] sm:$0xf]
    %v57 = vld [vmem:[#allocation2 + $0x2c] sm:$0xf]
    %v58 = vld [vmem:[#allocation2 + $0x30] sm:$0xf]
    %v59 = vld [vmem:[#allocation2 + $0x34] sm:$0xf]
    %v60 = vld [vmem:[#allocation2 + $0x38] sm:$0xf]
    %v61 = vld [vmem:[#allocation2 + $0x3c] sm:$0xf]
    %v62 = vld [vmem:[#allocation2 + $0x40] sm:$0xf]
    %v63 = vld [vmem:[#allocation2 + $0x44] sm:$0xf]
    %v64 = vld [vmem:[#allocation2 + $0x48] sm:$0xf]
    %v65 = vld [vmem:[#allocation2 + $0x4c] sm:$0xf]
    %v66 = vld [vmem:[#allocation2 + $0x50] sm:$0xf]
    %v67 = vld [vmem:[#allocation2 + $0x54] sm:$0xf]
    %v68 = vld [vmem:[#allocation2 + $0x58] sm:$0xf]
    %v69 = vld [vmem:[#allocation2 + $0x5c] sm:$0xf]
    %v70 = vld [vmem:[#allocation2 + $0x60] sm:$0xf]
    %v71 = vld [vmem:[#allocation2 + $0x64] sm:$0xf]
    %v72 = vld [vmem:[#allocation2 + $0x68] sm:$0xf]
    %v73 = vld [vmem:[#allocation2 + $0x6c] sm:$0xf]
    %v74 = vld [vmem:[#allocation2 + $0x70] sm:$0xf]
    %v75 = vld [vmem:[#allocation2 + $0x74] sm:$0xf]
    %v76 = vld [vmem:[#allocation2 + $0x78] sm:$0xf]
    %v77 = vld [vmem:[#allocation2 + $0x7c] sm:$0xf]
    %v78 = vld [vmem:[%s2] sm:$0x1]
    %v80 = vperm.slane %v78, 0
    %v84 = vunpack.c.l.b16 %v44
    %v85 = vunpack.c.h.b16 %v44
    %v86 = vunpack.c.l.b16 %v45
    %v87 = vunpack.c.h.b16 %v45
    %v88 = vpack.c.b16 %v86, %v84
    %v89 = vpack.c.b16 %v87, %v85
    %v124 = vunpack.c.l.b16 %v46
    %v125 = vunpack.c.l.b16 %v47
    %v126 = vunpack.c.l.b16 %v48
    %v127 = vunpack.c.l.b16 %v49
    %v128 = vunpack.c.l.b16 %v50
    %v129 = vunpack.c.l.b16 %v51
    %v130 = vunpack.c.l.b16 %v52
    %v131 = vunpack.c.l.b16 %v53
    %v132 = vunpack.c.l.b16 %v54
    %v133 = vunpack.c.l.b16 %v55
    %v134 = vunpack.c.l.b16 %v56
    %v135 = vunpack.c.l.b16 %v57
    %v136 = vunpack.c.l.b16 %v58
    %v137 = vunpack.c.l.b16 %v59
    %v138 = vunpack.c.l.b16 %v60
    %v139 = vunpack.c.l.b16 %v61
    %v140 = vunpack.c.l.b16 %v62
    %v141 = vunpack.c.l.b16 %v63
    %v142 = vunpack.c.l.b16 %v64
    %v143 = vunpack.c.l.b16 %v65
    %v144 = vunpack.c.l.b16 %v66
    %v145 = vunpack.c.l.b16 %v67
    %v146 = vunpack.c.l.b16 %v68
    %v147 = vunpack.c.l.b16 %v69
    %v148 = vunpack.c.l.b16 %v70
    %v149 = vunpack.c.l.b16 %v71
    %v150 = vunpack.c.l.b16 %v72
    %v151 = vunpack.c.l.b16 %v73
    %v152 = vunpack.c.l.b16 %v74
    %v153 = vunpack.c.l.b16 %v75
    %v154 = vunpack.c.l.b16 %v76
    %v155 = vunpack.c.l.b16 %v77
    %v156 = vpack.c.b16 %v125, %v124
    %v157 = vpack.c.b16 %v127, %v126
    %v158 = vpack.c.b16 %v129, %v128
    %v159 = vpack.c.b16 %v131, %v130
    %v160 = vpack.c.b16 %v133, %v132
    %v161 = vpack.c.b16 %v135, %v134
    %v162 = vpack.c.b16 %v137, %v136
    %v163 = vpack.c.b16 %v139, %v138
    %v164 = vpack.c.b16 %v141, %v140
    %v165 = vpack.c.b16 %v143, %v142
    %v166 = vpack.c.b16 %v145, %v144
    %v167 = vpack.c.b16 %v147, %v146
    %v168 = vpack.c.b16 %v149, %v148
    %v169 = vpack.c.b16 %v151, %v150
    %v170 = vpack.c.b16 %v153, %v152
    %v171 = vpack.c.b16 %v155, %v154
    %188 = vmatpush.bf16.msra.mxu0 %v163
    %189 = vmatpush.bf16.msra.mxu0 %v162
    %190 = vmatpush.bf16.msra.mxu0 %v161
    %191 = vmatpush.bf16.msra.mxu0 %v160
    %192 = vmatpush.bf16.msra.mxu0 %v159
    %193 = vmatpush.bf16.msra.mxu0 %v158
    %194 = vmatpush.bf16.msra.mxu0 %v157
    %195 = vmatpush.bf16.msra.mxu0 %v156
    %196 = vmatmul.bf16.gmra.mxu0 %v88
    %v197 = vpop.f32.mrf.mxu0
    %v198 = vadd.f32 %v80, %v197
    %v199 = vpop.f32.mrf.mxu0
    %v200 = vadd.f32 %v80, %v199
    %201 = vdwg.mxu0
    %202 = vmatpush.bf16.msra.mxu0 %v171
    %203 = vmatpush.bf16.msra.mxu0 %v170
    %204 = vmatpush.bf16.msra.mxu0 %v169
    %205 = vmatpush.bf16.msra.mxu0 %v168
    %206 = vmatpush.bf16.msra.mxu0 %v167
    %207 = vmatpush.bf16.msra.mxu0 %v166
    %208 = vmatpush.bf16.msra.mxu0 %v165
    %209 = vmatpush.bf16.msra.mxu0 %v164
    %210 = vmatmul.bf16.gmra.mxu0 %v89
    %v211 = vpop.f32.mrf.mxu0
    %v212 = vadd.f32 %v198, %v211
    %v213 = vpop.f32.mrf.mxu0
    %v214 = vadd.f32 %v200, %v213
    %215 = vdwg.mxu0
    %v216 = vmax.f32 %v212, 0.0
    %v217 = vmax.f32 %v214, 0.0
    %v218 = vpack.c.bf16 %v217, %v216
    %v219 = vld [vmem:[%s3] sm:$0xf]
    %v220 = vld [vmem:[%s3 + $0x4] sm:$0xf]
    %v221 = vld [vmem:[%s3 + $0x8] sm:$0xf]
    %v222 = vld [vmem:[%s3 + $0xc] sm:$0xf]
    %v223 = vld [vmem:[%s3 + $0x10] sm:$0xf]
    %v224 = vld [vmem:[%s3 + $0x14] sm:$0xf]
    %v225 = vld [vmem:[%s3 + $0x18] sm:$0xf]
    %v226 = vld [vmem:[%s3 + $0x1c] sm:$0xf]
    %v227 = vld [vmem:[%s3 + $0x20] sm:$0xf]
    %v228 = vld [vmem:[%s3 + $0x24] sm:$0xf]
    %v229 = vld [vmem:[%s3 + $0x28] sm:$0xf]
    %v230 = vld [vmem:[%s3 + $0x2c] sm:$0xf]
    %v231 = vld [vmem:[%s3 + $0x30] sm:$0xf]
    %v232 = vld [vmem:[%s3 + $0x34] sm:$0xf]
    %v233 = vld [vmem:[%s3 + $0x38] sm:$0xf]
    %v234 = vld [vmem:[%s3 + $0x3c] sm:$0xf]
    %v235 = vld [vmem:[%s4] sm:$0x1]
    %v237 = vperm.slane %v235, 0
    %v255 = vunpack.c.l.b16 %v219
    %v256 = vunpack.c.l.b16 %v220
    %v257 = vunpack.c.l.b16 %v221
    %v258 = vunpack.c.l.b16 %v222
    %v259 = vunpack.c.l.b16 %v223
    %v260 = vunpack.c.l.b16 %v224
    %v261 = vunpack.c.l.b16 %v225
    %v262 = vunpack.c.l.b16 %v226
    %v263 = vunpack.c.l.b16 %v227
    %v264 = vunpack.c.l.b16 %v228
    %v265 = vunpack.c.l.b16 %v229
    %v266 = vunpack.c.l.b16 %v230
    %v267 = vunpack.c.l.b16 %v231
    %v268 = vunpack.c.l.b16 %v232
    %v269 = vunpack.c.l.b16 %v233
    %v270 = vunpack.c.l.b16 %v234
    %v271 = vpack.c.b16 %v256, %v255
    %v272 = vpack.c.b16 %v258, %v257
    %v273 = vpack.c.b16 %v260, %v259
    %v274 = vpack.c.b16 %v262, %v261
    %v275 = vpack.c.b16 %v264, %v263
    %v276 = vpack.c.b16 %v266, %v265
    %v277 = vpack.c.b16 %v268, %v267
    %v278 = vpack.c.b16 %v270, %v269
    %287 = vmatpush.bf16.msra.mxu0 %v278
    %288 = vmatpush.bf16.msra.mxu0 %v277
    %289 = vmatpush.bf16.msra.mxu0 %v276
    %290 = vmatpush.bf16.msra.mxu0 %v275
    %291 = vmatpush.bf16.msra.mxu0 %v274
    %292 = vmatpush.bf16.msra.mxu0 %v273
    %293 = vmatpush.bf16.msra.mxu0 %v272
    %294 = vmatpush.bf16.msra.mxu0 %v271
    %295 = vmatmul.bf16.gmra.mxu0 %v218
    %v296 = vpop.f32.mrf.mxu0
    %v297 = vadd.f32 %v237, %v296
    %v298 = vpop.f32.mrf.mxu0
    %v299 = vadd.f32 %v237, %v298
    %300 = vdwg.mxu0
    %v301 = vmax.f32 %v297, 0.0
    %v302 = vmax.f32 %v299, 0.0
    %v303 = vpack.c.bf16 %v302, %v301
    %v304 = vld [vmem:[%s5] sm:$0xf]
    %v305 = vld [vmem:[%s5 + $0x4] sm:$0xf]
    %v306 = vld [vmem:[%s5 + $0x8] sm:$0xf]
    %v307 = vld [vmem:[%s5 + $0xc] sm:$0xf]
    %v308 = vld [vmem:[%s5 + $0x10] sm:$0xf]
    %v309 = vld [vmem:[%s5 + $0x14] sm:$0xf]
    %v310 = vld [vmem:[%s5 + $0x18] sm:$0xf]
    %v311 = vld [vmem:[%s5 + $0x1c] sm:$0xf]
    %v312 = vld [vmem:[%s6] sm:$0x1]
    %v314 = vperm.slane %v312, 0
    %v324 = vunpack.c.l.b16 %v304
    %v325 = vunpack.c.l.b16 %v305
    %v326 = vunpack.c.l.b16 %v306
    %v327 = vunpack.c.l.b16 %v307
    %v328 = vunpack.c.l.b16 %v308
    %v329 = vunpack.c.l.b16 %v309
    %v330 = vunpack.c.l.b16 %v310
    %v331 = vunpack.c.l.b16 %v311
    %v332 = vpack.c.b16 %v325, %v324
    %v333 = vpack.c.b16 %v327, %v326
    %v334 = vpack.c.b16 %v329, %v328
    %v335 = vpack.c.b16 %v331, %v330
    %vm340 = vcmask 523264
    %v342 = vsel %vm340, %v303, 0
    %344 = vmatpush.bf16.msra.mxu0 0
    %345 = vmatpush.bf16.msra.mxu0 0
    %346 = vmatpush.bf16.msra.mxu0 0
    %347 = vmatpush.bf16.msra.mxu0 0
    %348 = vmatpush.bf16.msra.mxu0 %v335
    %349 = vmatpush.bf16.msra.mxu0 %v334
    %350 = vmatpush.bf16.msra.mxu0 %v333
    %351 = vmatpush.bf16.msra.mxu0 %v332
    %352 = vmatmul.bf16.gmra.mxu0 %v342
    %v353 = vpop.f32.mrf.mxu0
    %v354 = vadd.f32 %v314, %v353
    %v355 = vpop.f32.mrf.mxu0
    %v356 = vadd.f32 %v314, %v355
    %357 = vdwg.mxu0
    %358 = vst [vmem:[#allocation5] sm:$0xff] %v354
    %359 = vst [vmem:[#allocation5 + $0x8] sm:$0xff] %v356
    // Predicated region
    $region34: #{tpu_custom_call.1} parent=1 // pred_check
      _
    $region35: #{tpu_custom_call.1} parent=1 // pred_check_branch
      %361 = sbr.rel (0) target = $region37
    $region36: #{tpu_custom_call.1} parent=1 // pred_region
      %363 = vsyncadd [#allocation4], 0
      %s364 = sshll.u32 [#allocation5], 4
      %s365 = int_to_ptr.vmem [resolvable:$true] %s364
      %s366 = sshll.u32 %s7, 4
      %s367 = int_to_ptr.hbm [resolvable:$true] %s366
      %372 = dma.vmem_to_hbm [thread:$0]  %s365, 256, %s367, [#allocation4], 128, 128, 8
    $region37: #{tpu_custom_call.1} parent=1 // pred_fallthru
      _
    // Predicated region
    $region38: #{tpu_custom_call.1} parent=1 // pred_check
      _
    $region39: #{tpu_custom_call.1} parent=1 // pred_check_branch
      %374 = sbr.rel (0) target = $region41
    $region40: #{tpu_custom_call.1} parent=1 // pred_region
      %376 = dma.done [#allocation4], 256
    $region41: #{tpu_custom_call.1} parent=1 // pred_fallthru
      _
    %377 = vsyncpa [#allocation3], 1
    %378 = vsyncpa [#allocation4], 1

</llo_original>
